<compile_context>
chip_gen: v5e
topology: v5e:2x2
jax: 0.10.0
libtpu: 0.0.40
codegen_flags: <defaults>
</compile_context>

<pallas_src>
import jax
import jax.numpy as jnp
from jax.experimental import pallas as pl
from jax.experimental.pallas import tpu as pltpu

K_IN = 784          # input features (unpadded; 784 = 49*16, bf16 sublane-aligned)
H1 = 128
H2 = 256
N_OUT = 10          # real logits
N_PAD = 128         # lane-dense padded output width


def mlp_kernel(x_ref, w1_ref, b1_ref, w2_ref, b2_ref, w3_ref, b3_ref, o_ref):
    # in-kernel f32 -> bf16 cast of the activation tile (free under mem-bound roofline)
    x = x_ref[...].astype(jnp.bfloat16)
    # hidden1: bf16 operands, f32 accumulate; bias + ReLU epilogue in f32
    h1 = jnp.dot(x, w1_ref[...], preferred_element_type=jnp.float32)
    h1 = jnp.maximum(h1 + b1_ref[...], 0.0).astype(jnp.bfloat16)
    # hidden2
    h2 = jnp.dot(h1, w2_ref[...], preferred_element_type=jnp.float32)
    h2 = jnp.maximum(h2 + b2_ref[...], 0.0).astype(jnp.bfloat16)
    # output layer (logits, padded to 128 lanes; no activation)
    logits = jnp.dot(h2, w3_ref[...], preferred_element_type=jnp.float32) + b3_ref[...]
    o_ref[...] = logits.astype(o_ref.dtype)


def prepare_params(params):
    """One-time prep: cast weights to bf16, pad the output layer N (10->128)."""
    w1 = params["w1"].astype(jnp.bfloat16)                       # (784, 128)
    w2 = params["w2"].astype(jnp.bfloat16)                       # (128, 256)
    w3 = params["w3"].astype(jnp.bfloat16)
    w3 = jnp.pad(w3, ((0, 0), (0, N_PAD - N_OUT)))               # (256, 128)
    b1 = params["b1"].astype(jnp.float32)                        # (1, 128)
    b2 = params["b2"].astype(jnp.float32)                        # (1, 256)
    b3 = jnp.pad(params["b3"].astype(jnp.float32),
                 ((0, 0), (0, N_PAD - N_OUT)))                   # (1, 128)
    return {"w1": w1, "b1": b1, "w2": w2, "b2": b2, "w3": w3, "b3": b3}


def _round_up(v, m):
    return ((v + m - 1) // m) * m


def _choose_tile_b(B, preferred=512):
    """Pick a batch tile: big enough to amortize per-step overhead, small enough to
    avoid padding waste on small batches, and (where possible) >= 2 grid steps so
    both v7x TensorCores get work."""
    b8 = _round_up(B, 8)
    if b8 <= preferred:
        half = b8 // 2
        if half >= 8 and half % 8 == 0:
            return half          # 2 grid steps, no extra padding beyond round-to-8
        return b8                # tiny batch: single step
    return preferred             # large batch: nb >= 2 automatically


def mnist_nn_forward(x, prepared, *, tile_b=None, out_dtype=jnp.float32):
    """x: [B, 784] float32 (passed raw; cast to bf16 in-kernel).
    prepared: output of prepare_params. Returns [B, 10] logits in out_dtype."""
    B = x.shape[0]
    if tile_b is None:
        tile_b = _choose_tile_b(B)
    nb = pl.cdiv(B, tile_b)
    B_pad = nb * tile_b

    # pad batch axis only (cheap; K axis is NOT padded and x is NOT pre-cast)
    if B_pad != B:
        x = jnp.pad(x, ((0, B_pad - B), (0, 0)))

    w1, b1 = prepared["w1"], prepared["b1"]
    w2, b2 = prepared["w2"], prepared["b2"]
    w3, b3 = prepared["w3"], prepared["b3"]

    def resident(shape):
        # weights/biases: same block every grid step -> stay resident in VMEM
        return pl.BlockSpec(shape, lambda i: (0, 0))

    flops = 2 * B_pad * (K_IN * H1 + H1 * H2 + H2 * N_PAD)
    bytes_accessed = (
        B_pad * K_IN * x.dtype.itemsize                       # x stream
        + B_pad * N_PAD * jnp.dtype(out_dtype).itemsize        # output writeback
        + sum(int(a.size) * a.dtype.itemsize
              for a in (w1, b1, w2, b2, w3, b3))               # resident params (once)
    )

    out = pl.pallas_call(
        mlp_kernel,
        out_shape=jax.ShapeDtypeStruct((B_pad, N_PAD), out_dtype),
        grid=(nb,),
        in_specs=[
            # (tile_b, 784): last dim equals full array dim -> no 128-multiple needed
            pl.BlockSpec((tile_b, K_IN), lambda i: (i, 0)),
            resident(w1.shape), resident(b1.shape),
            resident(w2.shape), resident(b2.shape),
            resident(w3.shape), resident(b3.shape),
        ],
        out_specs=pl.BlockSpec((tile_b, N_PAD), lambda i: (i, 0)),
        compiler_params=pltpu.CompilerParams(
            dimension_semantics=("parallel",),
        ),
        cost_estimate=pl.CostEstimate(
            flops=flops, transcendentals=0, bytes_accessed=bytes_accessed),
    )(x, w1, b1, w2, b2, w3, b3)

    # tiny slice; fuses into the consumer under jit
    return out[:B, :N_OUT]


def init_params(key):
    """Deterministic init mimicking nn.Linear default (uniform +/- 1/sqrt(fan_in))."""
    def linear(key, fan_in, fan_out):
        kw, kb = jax.random.split(key)
        bound = 1.0 / jnp.sqrt(fan_in)
        # stored as [in, out] (transposed vs. PyTorch) so kernel does x @ W + b
        w = jax.random.uniform(kw, (fan_in, fan_out), jnp.float32, -bound, bound)
        b = jax.random.uniform(kb, (1, fan_out), jnp.float32, -bound, bound)
        return w, b

    k1, k2, k3 = jax.random.split(key, 3)
    w1, b1 = linear(k1, K_IN, H1)
    w2, b2 = linear(k2, H1, H2)
    w3, b3 = linear(k3, H2, N_OUT)
    return {"w1": w1, "b1": b1, "w2": w2, "b2": b2, "w3": w3, "b3": b3}


def ref_forward(x, prepared):
    """Plain-JAX reference mimicking the kernel's numerics (bf16 ops, f32 acc)."""
    xb = x.astype(jnp.bfloat16)
    w3 = prepared["w3"][:, :N_OUT]                # drop zero N-padding cols
    b3 = prepared["b3"][:, :N_OUT]
    h1 = jnp.dot(xb, prepared["w1"], preferred_element_type=jnp.float32) + prepared["b1"]
    h1 = jnp.maximum(h1, 0.0).astype(jnp.bfloat16)
    h2 = jnp.dot(h1, prepared["w2"], preferred_element_type=jnp.float32) + prepared["b2"]
    h2 = jnp.maximum(h2, 0.0).astype(jnp.bfloat16)
    return jnp.dot(h2, w3, preferred_element_type=jnp.float32) + b3


if __name__ == "__main__":
    key = jax.random.PRNGKey(0)
    kp, kx = jax.random.split(key)
    params = init_params(kp)
    prepared = prepare_params(params)

    # Small batch; not a multiple of 8 -> exercises the batch-only padding path.
    B = 12
    x = jax.random.normal(kx, (B, K_IN), dtype=jnp.float32)

    out = mnist_nn_forward(x, prepared)
    out = jax.block_until_ready(out)

    ref = ref_forward(x, prepared)
    assert out.shape == (B, N_OUT)
    assert jnp.allclose(out, ref, atol=2e-2, rtol=2e-2), (
        float(jnp.max(jnp.abs(out - ref))))

    print("KERNEL_OK")
</pallas_src>

<mosaic_0001>
module attributes {stable_mosaic.version = 11 : i64} {
  func.func @mlp_kernel(%arg0: i32, %arg1: memref<8x784xf32, #tpu.memory_space<vmem>>, %arg2: memref<784x128xbf16, #tpu.memory_space<vmem>>, %arg3: memref<1x128xf32, #tpu.memory_space<vmem>>, %arg4: memref<128x256xbf16, #tpu.memory_space<vmem>>, %arg5: memref<1x256xf32, #tpu.memory_space<vmem>>, %arg6: memref<256x128xbf16, #tpu.memory_space<vmem>>, %arg7: memref<1x128xf32, #tpu.memory_space<vmem>>, %arg8: memref<8x128xf32, #tpu.memory_space<vmem>>) attributes {dimension_semantics = [#tpu.dimension_semantics<parallel>], iteration_bounds = array<i64: 2>, scalar_prefetch = 0 : i64, scratch_operands = 0 : i64, tpu.core_type = #tpu.core_type<tc>, window_params = [{transform_indices = @transform_0, window_bounds = array<i64: 8, 784>}, {pipeline_mode = #tpu.pipeline_mode<synchronous>, transform_indices = @transform_1, window_bounds = array<i64: 784, 128>}, {pipeline_mode = #tpu.pipeline_mode<synchronous>, transform_indices = @transform_2, window_bounds = array<i64: 1, 128>}, {pipeline_mode = #tpu.pipeline_mode<synchronous>, transform_indices = @transform_3, window_bounds = array<i64: 128, 256>}, {pipeline_mode = #tpu.pipeline_mode<synchronous>, transform_indices = @transform_4, window_bounds = array<i64: 1, 256>}, {pipeline_mode = #tpu.pipeline_mode<synchronous>, transform_indices = @transform_5, window_bounds = array<i64: 256, 128>}, {pipeline_mode = #tpu.pipeline_mode<synchronous>, transform_indices = @transform_6, window_bounds = array<i64: 1, 128>}, {transform_indices = @transform_7, window_bounds = array<i64: 8, 128>}]} {
    %c0 = arith.constant 0 : index
    %c0_0 = arith.constant 0 : index
    %0 = vector.load %arg1[%c0, %c0_0] : memref<8x784xf32, #tpu.memory_space<vmem>>, vector<8x784xf32>
    %1 = arith.truncf %0 : vector<8x784xf32> to vector<8x784xbf16>
    %c0_1 = arith.constant 0 : index
    %c0_2 = arith.constant 0 : index
    %2 = vector.load %arg2[%c0_1, %c0_2] : memref<784x128xbf16, #tpu.memory_space<vmem>>, vector<784x128xbf16>
    %cst = arith.constant dense<0.000000e+00> : vector<8x128xf32>
    %3 = tpu.matmul %1, %2, %cst {dimension_numbers = #tpu.dot_dimension_numbers<[1], [0], [0], [1], [0, 0, 1, 1], [], []>} : vector<8x784xbf16>, vector<784x128xbf16>, vector<8x128xf32> -> vector<8x128xf32>
    %c0_3 = arith.constant 0 : index
    %c0_4 = arith.constant 0 : index
    %4 = vector.load %arg3[%c0_3, %c0_4] : memref<1x128xf32, #tpu.memory_space<vmem>>, vector<1x128xf32>
    %5 = vector.broadcast %4 : vector<1x128xf32> to vector<8x128xf32>
    %6 = arith.addf %3, %5 : vector<8x128xf32>
    %cst_5 = arith.constant 0.000000e+00 : f32
    %7 = vector.broadcast %cst_5 : f32 to vector<8x128xf32>
    %8 = arith.maximumf %6, %7 : vector<8x128xf32>
    %9 = arith.truncf %8 : vector<8x128xf32> to vector<8x128xbf16>
    %c0_6 = arith.constant 0 : index
    %c0_7 = arith.constant 0 : index
    %10 = vector.load %arg4[%c0_6, %c0_7] : memref<128x256xbf16, #tpu.memory_space<vmem>>, vector<128x256xbf16>
    %cst_8 = arith.constant dense<0.000000e+00> : vector<8x256xf32>
    %11 = tpu.matmul %9, %10, %cst_8 {dimension_numbers = #tpu.dot_dimension_numbers<[1], [0], [0], [1], [0, 0, 1, 1], [], []>} : vector<8x128xbf16>, vector<128x256xbf16>, vector<8x256xf32> -> vector<8x256xf32>
    %c0_9 = arith.constant 0 : index
    %c0_10 = arith.constant 0 : index
    %12 = vector.load %arg5[%c0_9, %c0_10] : memref<1x256xf32, #tpu.memory_space<vmem>>, vector<1x256xf32>
    %13 = vector.broadcast %12 : vector<1x256xf32> to vector<8x256xf32>
    %14 = arith.addf %11, %13 : vector<8x256xf32>
    %cst_11 = arith.constant 0.000000e+00 : f32
    %15 = vector.broadcast %cst_11 : f32 to vector<8x256xf32>
    %16 = arith.maximumf %14, %15 : vector<8x256xf32>
    %17 = arith.truncf %16 : vector<8x256xf32> to vector<8x256xbf16>
    %c0_12 = arith.constant 0 : index
    %c0_13 = arith.constant 0 : index
    %18 = vector.load %arg6[%c0_12, %c0_13] : memref<256x128xbf16, #tpu.memory_space<vmem>>, vector<256x128xbf16>
    %cst_14 = arith.constant dense<0.000000e+00> : vector<8x128xf32>
    %19 = tpu.matmul %17, %18, %cst_14 {dimension_numbers = #tpu.dot_dimension_numbers<[1], [0], [0], [1], [0, 0, 1, 1], [], []>} : vector<8x256xbf16>, vector<256x128xbf16>, vector<8x128xf32> -> vector<8x128xf32>
    %c0_15 = arith.constant 0 : index
    %c0_16 = arith.constant 0 : index
    %20 = vector.load %arg7[%c0_15, %c0_16] : memref<1x128xf32, #tpu.memory_space<vmem>>, vector<1x128xf32>
    %21 = vector.broadcast %20 : vector<1x128xf32> to vector<8x128xf32>
    %22 = arith.addf %19, %21 : vector<8x128xf32>
    %c0_17 = arith.constant 0 : index
    %c0_18 = arith.constant 0 : index
    %23 = vector.load %arg8[%c0_17, %c0_18] : memref<8x128xf32, #tpu.memory_space<vmem>>, vector<8x128xf32>
    tpu.vector_store %arg8[%c0_17, %c0_18], %22 {strides = array<i32>} : memref<8x128xf32, #tpu.memory_space<vmem>>, vector<8x128xf32>,
    return
  }
  func.func @transform_0(%arg0: i32) -> (i32, i32) {
    %c0_i32 = arith.constant 0 : i32
    %c0_i32_0 = arith.constant 0 : i32
    return %arg0, %c0_i32 : i32, i32
  }
  func.func @transform_1(%arg0: i32) -> (i32, i32) {
    %c0_i32 = arith.constant 0 : i32
    %c0_i32_0 = arith.constant 0 : i32
    %c0_i32_1 = arith.constant 0 : i32
    return %c0_i32, %c0_i32_0 : i32, i32
  }
  func.func @transform_2(%arg0: i32) -> (i32, i32) {
    %c0_i32 = arith.constant 0 : i32
    %c0_i32_0 = arith.constant 0 : i32
    %c0_i32_1 = arith.constant 0 : i32
    return %c0_i32, %c0_i32_0 : i32, i32
  }
  func.func @transform_3(%arg0: i32) -> (i32, i32) {
    %c0_i32 = arith.constant 0 : i32
    %c0_i32_0 = arith.constant 0 : i32
    %c0_i32_1 = arith.constant 0 : i32
    return %c0_i32, %c0_i32_0 : i32, i32
  }
  func.func @transform_4(%arg0: i32) -> (i32, i32) {
    %c0_i32 = arith.constant 0 : i32
    %c0_i32_0 = arith.constant 0 : i32
    %c0_i32_1 = arith.constant 0 : i32
    return %c0_i32, %c0_i32_0 : i32, i32
  }
  func.func @transform_5(%arg0: i32) -> (i32, i32) {
    %c0_i32 = arith.constant 0 : i32
    %c0_i32_0 = arith.constant 0 : i32
    %c0_i32_1 = arith.constant 0 : i32
    return %c0_i32, %c0_i32_0 : i32, i32
  }
  func.func @transform_6(%arg0: i32) -> (i32, i32) {
    %c0_i32 = arith.constant 0 : i32
    %c0_i32_0 = arith.constant 0 : i32
    %c0_i32_1 = arith.constant 0 : i32
    return %c0_i32, %c0_i32_0 : i32, i32
  }
  func.func @transform_7(%arg0: i32) -> (i32, i32) {
    %c0_i32 = arith.constant 0 : i32
    %c0_i32_0 = arith.constant 0 : i32
    return %arg0, %c0_i32 : i32, i32
  }
}

</mosaic_0001>

<llo_original>
// kernel: tpu_custom_call.1
$region0: #{tpu_custom_call.1}
  #allocation0 [shape = 'u32[]', space=smem, size = 0x4, offset = 0x4, fixed_abs, tag = 'smem constant byte address 0x4 - core index']
  #allocation1 [shape = 'u32[72,128]{1,0:T(1,128)}', space=vmem, size = 0x9000, scoped, tag = 'internal scratch']
  %s0 = inlined_call_operand.hbm [shape: f32[16,784], index: 0, kind: input, shape index: {}]
  %s1 = inlined_call_operand.hbm [shape: bf16[784,128], index: 1, kind: input, shape index: {}]
  %s2 = inlined_call_operand.vmem [shape: f32[1,128], index: 2, kind: input, shape index: {}]
  %s3 = inlined_call_operand.hbm [shape: bf16[128,256], index: 3, kind: input, shape index: {}]
  %s4 = inlined_call_operand.vmem [shape: f32[1,256], index: 4, kind: input, shape index: {}]
  %s5 = inlined_call_operand.hbm [shape: bf16[256,128], index: 5, kind: input, shape index: {}]
  %s6 = inlined_call_operand.vmem [shape: f32[1,128], index: 6, kind: input, shape index: {}]
  %s7 = inlined_call_operand.hbm [shape: f32[16,128], index: 7, kind: output, shape index: {}]
  %s8 = sld [smem:[#allocation0]]
  $region77: #{tpu_custom_call.1} parent=0
    _
  %s10 = ssub.s32 1, %s8
  %s11 = scalar_select 0, %s10, %s8
  $region1: #{tpu_custom_call.1} parent=0
    #allocation2 [shape = 'u8[57344]{0}', space=vmem, size = 0xe000, scoped, tag = 'input window, operand 0']
    #allocation3 [shape = 's32[2]{0}', space=sflag, size = 0x8, scoped, tag = 'scoped memory for tpu_custom_call.1']
    #allocation4 [shape = 's32[2]{0}', space=sflag, size = 0x8, scoped, tag = 'scoped memory for tpu_custom_call.1']
    #allocation5 [shape = 'u8[200704]{0}', space=vmem, size = 0x31000, scoped, tag = 'input window, operand 1, single buffered']
    #allocation6 [shape = 's32[1]{0}', space=sflag, size = 0x4, scoped, tag = 'scoped memory for tpu_custom_call.1']
    #allocation7 [shape = 'u8[65536]{0}', space=vmem, size = 0x10000, scoped, tag = 'input window, operand 3, single buffered']
    #allocation8 [shape = 'u8[65536]{0}', space=vmem, size = 0x10000, scoped, tag = 'input window, operand 5, single buffered']
    #allocation9 [shape = 's32[1]{0}', space=sflag, size = 0x4, scoped, tag = 'scoped memory for tpu_custom_call.1']
    #allocation10 [shape = 'u8[8192]{0}', space=vmem, size = 0x2000, scoped, tag = 'output window, operand 0']
    %12 = vsyncpa [#allocation3], 0
    %s13 = scalar_lea.sflag [#allocation3], 1
    %14 = vsyncpa %s13, 0
    %15 = vsyncpa [#allocation6], 0
    %16 = vsyncpa [#allocation9], 0
    %17 = vsyncpa [#allocation4], 0
    %s18 = scalar_lea.sflag [#allocation4], 1
    %19 = vsyncpa %s18, 0
    loop: start=0, step=1, limit=4
    $region2: #{tpu_custom_call.1} parent=1 // loop_pre_header
      _
    $region3: #{tpu_custom_call.1} parent=1 // loop_header
      %s21 = sphi 0, %s25
      %p22 = scmp.ge.s32.totalorder %s21, 4
      %s31 = sphi 0, %s33
      %s34 = sphi 0, %s31
      %s35 = sphi 0, %s34
      %s51 = sphi 0, %s35
      %s55 = sphi 0, %s55
      %s57 = sphi 0, %s55
      %s58 = sphi 0, %s57
      %s72 = sphi 0, %s58
      %s76 = sphi 0, %s76
      %s78 = sphi 0, %s76
      %s79 = sphi 0, %s78
      %s93 = sphi 0, %s79
      %s97 = sphi 0, %s97
      %s99 = sphi 0, %s97
      %s100 = sphi 0, %s99
      %s114 = sphi 0, %s100
      %s118 = sphi 0, %s118
      %s120 = sphi 0, %s118
      %s121 = sphi 0, %s120
      %s135 = sphi 0, %s121
      %s139 = sphi 0, %s139
      %s141 = sphi 0, %s139
      %s142 = sphi 0, %s141
      %s156 = sphi 0, %s142
      %s160 = sphi 0, %s160
      %s162 = sphi 0, %s160
      %s163 = sphi 0, %s162
      %s177 = sphi 0, %s163
      %s183 = sphi 0, %s185
      %s186 = sphi 0, %s183
      %s187 = sphi 0, %s186
      %s203 = sphi 0, %s187
    $region4: #{tpu_custom_call.1} parent=1 // loop_header_branch
      %24 = sbr.rel (%p22) target = $region8
    $region5: #{tpu_custom_call.1} parent=1 // loop_body
      %s26 = ssub.s32 %s21, 1
      %s27 = ssub.s32 %s21, 2
      %s28 = sadd.s32 %s21, 1
      %s29 = ssub.s32 %s21, %s28
      %p30 = scmp.eq.s32.totalorder %s29, 0
      %s32 = sadd.s32 %s31, 1
      %s33 = scalar_select %p30, %s31, %s32
      %p36 = pneg %p30
      %p37 = scmp.eq.s32.totalorder %s21, 1
      %p38 = por %p36, %p37
      %p39 = scmp.ne.s32.totalorder %s31, %s34
      %p40 = scmp.eq.s32.totalorder %s21, 0
      %p41 = por %p39, %p40
      %p42 = scmp.ne.s32.totalorder %s31, %s34
      %p43 = scmp.eq.s32.totalorder %s26, 1
      %p44 = por %p42, %p43
      %p45 = scmp.ne.s32.totalorder %s34, %s35
      %p46 = scmp.eq.s32.totalorder %s26, 0
      %p47 = por %p45, %p46
      %p48 = scmp.ne.s32.totalorder %s34, %s35
      %p49 = scmp.eq.s32.totalorder %s27, 1
      %p50 = por %p48, %p49
      %p52 = scmp.ne.s32.totalorder %s35, %s51
      %p53 = scmp.eq.s32.totalorder %s27, 0
      %p54 = por %p52, %p53
      %s56 = sadd.s32 %s55, 1
      %p59 = scmp.eq.s32.totalorder %s21, 1
      %p60 = scmp.ne.s32.totalorder %s55, %s57
      %p61 = scmp.eq.s32.totalorder %s21, 0
      %p62 = por %p60, %p61
      %p63 = scmp.ne.s32.totalorder %s55, %s57
      %p64 = scmp.eq.s32.totalorder %s26, 1
      %p65 = por %p63, %p64
      %p66 = scmp.ne.s32.totalorder %s57, %s58
      %p67 = scmp.eq.s32.totalorder %s26, 0
      %p68 = por %p66, %p67
      %p69 = scmp.ne.s32.totalorder %s57, %s58
      %p70 = scmp.eq.s32.totalorder %s27, 1
      %p71 = por %p69, %p70
      %p73 = scmp.ne.s32.totalorder %s58, %s72
      %p74 = scmp.eq.s32.totalorder %s27, 0
      %p75 = por %p73, %p74
      %s77 = sadd.s32 %s76, 1
      %p80 = scmp.eq.s32.totalorder %s21, 1
      %p81 = scmp.ne.s32.totalorder %s76, %s78
      %p82 = scmp.eq.s32.totalorder %s21, 0
      %p83 = por %p81, %p82
      %p84 = scmp.ne.s32.totalorder %s76, %s78
      %p85 = scmp.eq.s32.totalorder %s26, 1
      %p86 = por %p84, %p85
      %p87 = scmp.ne.s32.totalorder %s78, %s79
      %p88 = scmp.eq.s32.totalorder %s26, 0
      %p89 = por %p87, %p88
      %p90 = scmp.ne.s32.totalorder %s78, %s79
      %p91 = scmp.eq.s32.totalorder %s27, 1
      %p92 = por %p90, %p91
      %p94 = scmp.ne.s32.totalorder %s79, %s93
      %p95 = scmp.eq.s32.totalorder %s27, 0
      %p96 = por %p94, %p95
      %s98 = sadd.s32 %s97, 1
      %p101 = scmp.eq.s32.totalorder %s21, 1
      %p102 = scmp.ne.s32.totalorder %s97, %s99
      %p103 = scmp.eq.s32.totalorder %s21, 0
      %p104 = por %p102, %p103
      %p105 = scmp.ne.s32.totalorder %s97, %s99
      %p106 = scmp.eq.s32.totalorder %s26, 1
      %p107 = por %p105, %p106
      %p108 = scmp.ne.s32.totalorder %s99, %s100
      %p109 = scmp.eq.s32.totalorder %s26, 0
      %p110 = por %p108, %p109
      %p111 = scmp.ne.s32.totalorder %s99, %s100
      %p112 = scmp.eq.s32.totalorder %s27, 1
      %p113 = por %p111, %p112
      %p115 = scmp.ne.s32.totalorder %s100, %s114
      %p116 = scmp.eq.s32.totalorder %s27, 0
      %p117 = por %p115, %p116
      %s119 = sadd.s32 %s118, 1
      %p122 = scmp.eq.s32.totalorder %s21, 1
      %p123 = scmp.ne.s32.totalorder %s118, %s120
      %p124 = scmp.eq.s32.totalorder %s21, 0
      %p125 = por %p123, %p124
      %p126 = scmp.ne.s32.totalorder %s118, %s120
      %p127 = scmp.eq.s32.totalorder %s26, 1
      %p128 = por %p126, %p127
      %p129 = scmp.ne.s32.totalorder %s120, %s121
      %p130 = scmp.eq.s32.totalorder %s26, 0
      %p131 = por %p129, %p130
      %p132 = scmp.ne.s32.totalorder %s120, %s121
      %p133 = scmp.eq.s32.totalorder %s27, 1
      %p134 = por %p132, %p133
      %p136 = scmp.ne.s32.totalorder %s121, %s135
      %p137 = scmp.eq.s32.totalorder %s27, 0
      %p138 = por %p136, %p137
      %s140 = sadd.s32 %s139, 1
      %p143 = scmp.eq.s32.totalorder %s21, 1
      %p144 = scmp.ne.s32.totalorder %s139, %s141
      %p145 = scmp.eq.s32.totalorder %s21, 0
      %p146 = por %p144, %p145
      %p147 = scmp.ne.s32.totalorder %s139, %s141
      %p148 = scmp.eq.s32.totalorder %s26, 1
      %p149 = por %p147, %p148
      %p150 = scmp.ne.s32.totalorder %s141, %s142
      %p151 = scmp.eq.s32.totalorder %s26, 0
      %p152 = por %p150, %p151
      %p153 = scmp.ne.s32.totalorder %s141, %s142
      %p154 = scmp.eq.s32.totalorder %s27, 1
      %p155 = por %p153, %p154
      %p157 = scmp.ne.s32.totalorder %s142, %s156
      %p158 = scmp.eq.s32.totalorder %s27, 0
      %p159 = por %p157, %p158
      %s161 = sadd.s32 %s160, 1
      %p164 = scmp.eq.s32.totalorder %s21, 1
      %p165 = scmp.ne.s32.totalorder %s160, %s162
      %p166 = scmp.eq.s32.totalorder %s21, 0
      %p167 = por %p165, %p166
      %p168 = scmp.ne.s32.totalorder %s160, %s162
      %p169 = scmp.eq.s32.totalorder %s26, 1
      %p170 = por %p168, %p169
      %p171 = scmp.ne.s32.totalorder %s162, %s163
      %p172 = scmp.eq.s32.totalorder %s26, 0
      %p173 = por %p171, %p172
      %p174 = scmp.ne.s32.totalorder %s162, %s163
      %p175 = scmp.eq.s32.totalorder %s27, 1
      %p176 = por %p174, %p175
      %p178 = scmp.ne.s32.totalorder %s163, %s177
      %p179 = scmp.eq.s32.totalorder %s27, 0
      %p180 = por %p178, %p179
      %s181 = ssub.s32 %s21, %s28
      %p182 = scmp.eq.s32.totalorder %s181, 0
      %s184 = sadd.s32 %s183, 1
      %s185 = scalar_select %p182, %s183, %s184
      %p188 = pneg %p182
      %p189 = scmp.eq.s32.totalorder %s21, 1
      %p190 = por %p188, %p189
      %p191 = scmp.ne.s32.totalorder %s183, %s186
      %p192 = scmp.eq.s32.totalorder %s21, 0
      %p193 = por %p191, %p192
      %p194 = scmp.ne.s32.totalorder %s183, %s186
      %p195 = scmp.eq.s32.totalorder %s26, 1
      %p196 = por %p194, %p195
      %p197 = scmp.ne.s32.totalorder %s186, %s187
      %p198 = scmp.eq.s32.totalorder %s26, 0
      %p199 = por %p197, %p198
      %p200 = scmp.ne.s32.totalorder %s186, %s187
      %p201 = scmp.eq.s32.totalorder %s27, 1
      %p202 = por %p200, %p201
      %p204 = scmp.ne.s32.totalorder %s187, %s203
      %p205 = scmp.eq.s32.totalorder %s27, 0
      %p206 = por %p204, %p205
      %p207 = scmp.le.s32.totalorder 1, %s21
      %p208 = scmp.lt.s32.totalorder %s21, 3
      %p209 = pnand %p207, %p208
      %p210 = pneg %p209
      // Predicated region
      $region9: #{tpu_custom_call.1} parent=5 // pred_check
        _
      $region10: #{tpu_custom_call.1} parent=5 // pred_check_branch
        %212 = sbr.rel (%p209) target = $region12
      $region11: #{tpu_custom_call.1} parent=5 // pred_region
        %s213 = ssub.s32 %s21, 1
        // Predicated region
        $region13: #{tpu_custom_call.1} parent=11 // pred_check
          %p214 = pneg %p68
        $region14: #{tpu_custom_call.1} parent=11 // pred_check_branch
          %216 = sbr.rel (%p214) target = $region16
        $region15: #{tpu_custom_call.1} parent=11 // pred_region
          %218 = vsyncadd [#allocation6], 0
          %s219 = sshll.u32 %s1, 4
          %s220 = int_to_ptr.hbm [resolvable:$true] %s219
          %s221 = sshll.u32 [#allocation5], 4
          %s222 = int_to_ptr.vmem [resolvable:$true] %s221
          %227 = dma.hbm_to_vmem [thread:$0]  %s220, 6272, %s222, [#allocation6], 64, 64, 4
        $region16: #{tpu_custom_call.1} parent=11 // pred_fallthru
          _
        // Predicated region
        $region17: #{tpu_custom_call.1} parent=11 // pred_check
          %p228 = pneg %p89
        $region18: #{tpu_custom_call.1} parent=11 // pred_check_branch
          %230 = sbr.rel (%p228) target = $region20
        $region19: #{tpu_custom_call.1} parent=11 // pred_region
          _
        $region20: #{tpu_custom_call.1} parent=11 // pred_fallthru
          _
        // Predicated region
        $region21: #{tpu_custom_call.1} parent=11 // pred_check
          %p231 = pneg %p110
        $region22: #{tpu_custom_call.1} parent=11 // pred_check_branch
          %233 = sbr.rel (%p231) target = $region24
        $region23: #{tpu_custom_call.1} parent=11 // pred_region
          %235 = vsyncadd [#allocation6], 0
          %s236 = sshll.u32 %s3, 4
          %s237 = int_to_ptr.hbm [resolvable:$true] %s236
          %s238 = sshll.u32 [#allocation7], 4
          %s239 = int_to_ptr.vmem [resolvable:$true] %s238
          %244 = dma.hbm_to_vmem [thread:$0]  %s237, 2048, %s239, [#allocation6], 128, 128, 8
        $region24: #{tpu_custom_call.1} parent=11 // pred_fallthru
          _
        // Predicated region
        $region25: #{tpu_custom_call.1} parent=11 // pred_check
          %p245 = pneg %p131
        $region26: #{tpu_custom_call.1} parent=11 // pred_check_branch
          %247 = sbr.rel (%p245) target = $region28
        $region27: #{tpu_custom_call.1} parent=11 // pred_region
          _
        $region28: #{tpu_custom_call.1} parent=11 // pred_fallthru
          _
        // Predicated region
        $region29: #{tpu_custom_call.1} parent=11 // pred_check
          %p248 = pneg %p152
        $region30: #{tpu_custom_call.1} parent=11 // pred_check_branch
          %250 = sbr.rel (%p248) target = $region32
        $region31: #{tpu_custom_call.1} parent=11 // pred_region
          %252 = vsyncadd [#allocation9], 0
          %s253 = sshll.u32 %s5, 4
          %s254 = int_to_ptr.hbm [resolvable:$true] %s253
          %s255 = sshll.u32 [#allocation8], 4
          %s256 = int_to_ptr.vmem [resolvable:$true] %s255
          %261 = dma.hbm_to_vmem [thread:$0]  %s254, 2048, %s256, [#allocation9], 64, 64, 4
        $region32: #{tpu_custom_call.1} parent=11 // pred_fallthru
          _
        // Predicated region
        $region33: #{tpu_custom_call.1} parent=11 // pred_check
          %p262 = pneg %p173
        $region34: #{tpu_custom_call.1} parent=11 // pred_check_branch
          %264 = sbr.rel (%p262) target = $region36
        $region35: #{tpu_custom_call.1} parent=11 // pred_region
          _
        $region36: #{tpu_custom_call.1} parent=11 // pred_fallthru
          _
      $region12: #{tpu_custom_call.1} parent=5 // pred_fallthru
        _
      %p265 = scmp.lt.s32.totalorder %s21, 2
      // Predicated region
      $region37: #{tpu_custom_call.1} parent=5 // pred_check
        %p266 = pneg %p265
      $region38: #{tpu_custom_call.1} parent=5 // pred_check_branch
        %268 = sbr.rel (%p266) target = $region40
      $region39: #{tpu_custom_call.1} parent=5 // pred_region
        // Predicated region
        $region41: #{tpu_custom_call.1} parent=39 // pred_check
          %p269 = pneg %p41
        $region42: #{tpu_custom_call.1} parent=39 // pred_check_branch
          %271 = sbr.rel (%p269) target = $region44
        $region43: #{tpu_custom_call.1} parent=39 // pred_region
          %s272 = sand.u32 %s31, 1
          %s273 = scalar_lea.sflag [#allocation3], %s272
          %s274 = sand.u32 %s31, 1
          %s275 = smul.addr %s274, 56
          %s276 = scalar_lea.vmem [#allocation2], %s275
          %278 = vsyncadd %s273, 0
          %s279 = smul.addr %s21, 7
          %s280 = smul.addr %s279, 8
          %s281 = scalar_lea.hbm %s0, %s280
          %s283 = sshll.u32 %s281, 4
          %s284 = int_to_ptr.hbm [resolvable:$true] %s283
          %s285 = sshll.u32 %s276, 4
          %s286 = int_to_ptr.vmem [resolvable:$true] %s285
          %288 = dma.hbm_to_vmem [thread:$0]  %s284, 896, %s286, %s273
        $region44: #{tpu_custom_call.1} parent=39 // pred_fallthru
          _
      $region40: #{tpu_custom_call.1} parent=5 // pred_fallthru
        _
      %p289 = scmp.le.s32.totalorder 1, %s21
      %p290 = scmp.lt.s32.totalorder %s21, 3
      %p291 = pnand %p289, %p290
      %p292 = pneg %p291
      // Predicated region
      $region45: #{tpu_custom_call.1} parent=5 // pred_check
        _
      $region46: #{tpu_custom_call.1} parent=5 // pred_check_branch
        %294 = sbr.rel (%p291) target = $region48
      $region47: #{tpu_custom_call.1} parent=5 // pred_region
        %s295 = ssub.s32 %s21, 1
        %s296 = sand.u32 %s34, 1
        %s297 = scalar_lea.sflag [#allocation3], %s296
        %s298 = sand.u32 %s34, 1
        %s299 = smul.addr %s298, 56
        %s300 = scalar_lea.vmem [#allocation2], %s299
        // Predicated region
        $region49: #{tpu_custom_call.1} parent=47 // pred_check
          %p301 = pneg %p47
        $region50: #{tpu_custom_call.1} parent=47 // pred_check_branch
          %303 = sbr.rel (%p301) target = $region52
        $region51: #{tpu_custom_call.1} parent=47 // pred_region
          %305 = dma.done %s297, 896
        $region52: #{tpu_custom_call.1} parent=47 // pred_fallthru
          _
        // Predicated region
        $region53: #{tpu_custom_call.1} parent=47 // pred_check
          %p306 = pneg %p68
        $region54: #{tpu_custom_call.1} parent=47 // pred_check_branch
          %308 = sbr.rel (%p306) target = $region56
        $region55: #{tpu_custom_call.1} parent=47 // pred_region
          %310 = dma.done [#allocation6], 6272
        $region56: #{tpu_custom_call.1} parent=47 // pred_fallthru
          _
        // Predicated region
        $region57: #{tpu_custom_call.1} parent=47 // pred_check
          %p311 = pneg %p110
        $region58: #{tpu_custom_call.1} parent=47 // pred_check_branch
          %313 = sbr.rel (%p311) target = $region60
        $region59: #{tpu_custom_call.1} parent=47 // pred_region
          %315 = dma.done [#allocation6], 2048
        $region60: #{tpu_custom_call.1} parent=47 // pred_fallthru
          _
        // Predicated region
        $region61: #{tpu_custom_call.1} parent=47 // pred_check
          %p316 = pneg %p152
        $region62: #{tpu_custom_call.1} parent=47 // pred_check_branch
          %318 = sbr.rel (%p316) target = $region64
        $region63: #{tpu_custom_call.1} parent=47 // pred_region
          %320 = dma.done [#allocation9], 2048
        $region64: #{tpu_custom_call.1} parent=47 // pred_fallthru
          _
        %s321 = sand.u32 %s34, 1
        %s322 = scalar_lea.sflag [#allocation3], %s321
        %s323 = sand.u32 %s34, 1
        %s324 = smul.addr %s323, 56
        %s325 = scalar_lea.vmem [#allocation2], %s324
        %p326 = pneg %p47
        %p327 = pneg %p44
        %p328 = pneg %p68
        %p329 = pneg %p65
        %p330 = pneg %p89
        %p331 = pneg %p86
        %p332 = pneg %p110
        %p333 = pneg %p107
        %p334 = pneg %p131
        %p335 = pneg %p128
        %p336 = pneg %p152
        %p337 = pneg %p149
        %p338 = pneg %p173
        %p339 = pneg %p170
        %p340 = pneg %p199
        %p341 = pneg %p196
        %s342 = sand.u32 %s186, 1
        %s343 = scalar_lea.sflag [#allocation4], %s342
        %s344 = sand.u32 %s186, 1
        %s345 = smul.addr %s344, 8
        %s346 = scalar_lea.vmem [#allocation10], %s345
        %v348 = vld [vmem:[%s300] sm:$0xff]
        %v349 = vld [vmem:[%s300 + $0x8] sm:$0xff]
        %v350 = vld [vmem:[%s300 + $0x10] sm:$0xff]
        %v351 = vld [vmem:[%s300 + $0x18] sm:$0xff]
        %v352 = vld [vmem:[%s300 + $0x20] sm:$0xff]
        %v353 = vld [vmem:[%s300 + $0x28] sm:$0xff]
        %v354 = vld [vmem:[%s300 + $0x30] sm:$0xff]
        %v355 = vpack.c.bf16 %v348, %v348
        %v356 = vpack.c.bf16 %v349, %v349
        %v357 = vpack.c.bf16 %v350, %v350
        %v358 = vpack.c.bf16 %v351, %v351
        %v359 = vpack.c.bf16 %v352, %v352
        %v360 = vpack.c.bf16 %v353, %v353
        %v361 = vpack.c.bf16 %v354, %v354
        %v362 = vld [vmem:[#allocation5] sm:$0xf]
        %v363 = vld [vmem:[#allocation5 + $0x4] sm:$0xf]
        %v364 = vld [vmem:[#allocation5 + $0x8] sm:$0xf]
        %v365 = vld [vmem:[#allocation5 + $0xc] sm:$0xf]
        %v366 = vld [vmem:[#allocation5 + $0x10] sm:$0xf]
        %v367 = vld [vmem:[#allocation5 + $0x14] sm:$0xf]
        %v368 = vld [vmem:[#allocation5 + $0x18] sm:$0xf]
        %v369 = vld [vmem:[#allocation5 + $0x1c] sm:$0xf]
        %v370 = vld [vmem:[#allocation5 + $0x20] sm:$0xf]
        %v371 = vld [vmem:[#allocation5 + $0x24] sm:$0xf]
        %v372 = vld [vmem:[#allocation5 + $0x28] sm:$0xf]
        %v373 = vld [vmem:[#allocation5 + $0x2c] sm:$0xf]
        %v374 = vld [vmem:[#allocation5 + $0x30] sm:$0xf]
        %v375 = vld [vmem:[#allocation5 + $0x34] sm:$0xf]
        %v376 = vld [vmem:[#allocation5 + $0x38] sm:$0xf]
        %v377 = vld [vmem:[#allocation5 + $0x3c] sm:$0xf]
        %v378 = vld [vmem:[#allocation5 + $0x40] sm:$0xf]
        %v379 = vld [vmem:[#allocation5 + $0x44] sm:$0xf]
        %v380 = vld [vmem:[#allocation5 + $0x48] sm:$0xf]
        %v381 = vld [vmem:[#allocation5 + $0x4c] sm:$0xf]
        %v382 = vld [vmem:[#allocation5 + $0x50] sm:$0xf]
        %v383 = vld [vmem:[#allocation5 + $0x54] sm:$0xf]
        %v384 = vld [vmem:[#allocation5 + $0x58] sm:$0xf]
        %v385 = vld [vmem:[#allocation5 + $0x5c] sm:$0xf]
        %v386 = vld [vmem:[#allocation5 + $0x60] sm:$0xf]
        %v387 = vld [vmem:[#allocation5 + $0x64] sm:$0xf]
        %v388 = vld [vmem:[#allocation5 + $0x68] sm:$0xf]
        %v389 = vld [vmem:[#allocation5 + $0x6c] sm:$0xf]
        %v390 = vld [vmem:[#allocation5 + $0x70] sm:$0xf]
        %v391 = vld [vmem:[#allocation5 + $0x74] sm:$0xf]
        %v392 = vld [vmem:[#allocation5 + $0x78] sm:$0xf]
        %v393 = vld [vmem:[#allocation5 + $0x7c] sm:$0xf]
        %v394 = vld [vmem:[#allocation5 + $0x80] sm:$0xf]
        %v395 = vld [vmem:[#allocation5 + $0x84] sm:$0xf]
        %v396 = vld [vmem:[#allocation5 + $0x88] sm:$0xf]
        %v397 = vld [vmem:[#allocation5 + $0x8c] sm:$0xf]
        %v398 = vld [vmem:[#allocation5 + $0x90] sm:$0xf]
        %v399 = vld [vmem:[#allocation5 + $0x94] sm:$0xf]
        %v400 = vld [vmem:[#allocation5 + $0x98] sm:$0xf]
        %v401 = vld [vmem:[#allocation5 + $0x9c] sm:$0xf]
        %v402 = vld [vmem:[#allocation5 + $0xa0] sm:$0xf]
        %v403 = vld [vmem:[#allocation5 + $0xa4] sm:$0xf]
        %v404 = vld [vmem:[#allocation5 + $0xa8] sm:$0xf]
        %v405 = vld [vmem:[#allocation5 + $0xac] sm:$0xf]
        %v406 = vld [vmem:[#allocation5 + $0xb0] sm:$0xf]
        %v407 = vld [vmem:[#allocation5 + $0xb4] sm:$0xf]
        %v408 = vld [vmem:[#allocation5 + $0xb8] sm:$0xf]
        %v409 = vld [vmem:[#allocation5 + $0xbc] sm:$0xf]
        %v410 = vld [vmem:[#allocation5 + $0xc0] sm:$0xf]
        %v411 = vld [vmem:[#allocation5 + $0xc4] sm:$0xf]
        %v412 = vld [vmem:[#allocation5 + $0xc8] sm:$0xf]
        %v413 = vld [vmem:[#allocation5 + $0xcc] sm:$0xf]
        %v414 = vld [vmem:[#allocation5 + $0xd0] sm:$0xf]
        %v415 = vld [vmem:[#allocation5 + $0xd4] sm:$0xf]
        %v416 = vld [vmem:[#allocation5 + $0xd8] sm:$0xf]
        %v417 = vld [vmem:[#allocation5 + $0xdc] sm:$0xf]
        %v418 = vld [vmem:[#allocation5 + $0xe0] sm:$0xf]
        %v419 = vld [vmem:[#allocation5 + $0xe4] sm:$0xf]
        %v420 = vld [vmem:[#allocation5 + $0xe8] sm:$0xf]
        %v421 = vld [vmem:[#allocation5 + $0xec] sm:$0xf]
        %v422 = vld [vmem:[#allocation5 + $0xf0] sm:$0xf]
        %v423 = vld [vmem:[#allocation5 + $0xf4] sm:$0xf]
        %v424 = vld [vmem:[#allocation5 + $0xf8] sm:$0xf]
        %v425 = vld [vmem:[#allocation5 + $0xfc] sm:$0xf]
        %v426 = vld [vmem:[#allocation5 + $0x100] sm:$0xf]
        %v427 = vld [vmem:[#allocation5 + $0x104] sm:$0xf]
        %v428 = vld [vmem:[#allocation5 + $0x108] sm:$0xf]
        %v429 = vld [vmem:[#allocation5 + $0x10c] sm:$0xf]
        %v430 = vld [vmem:[#allocation5 + $0x110] sm:$0xf]
        %v431 = vld [vmem:[#allocation5 + $0x114] sm:$0xf]
        %v432 = vld [vmem:[#allocation5 + $0x118] sm:$0xf]
        %v433 = vld [vmem:[#allocation5 + $0x11c] sm:$0xf]
        %v434 = vld [vmem:[#allocation5 + $0x120] sm:$0xf]
        %v435 = vld [vmem:[#allocation5 + $0x124] sm:$0xf]
        %v436 = vld [vmem:[#allocation5 + $0x128] sm:$0xf]
        %v437 = vld [vmem:[#allocation5 + $0x12c] sm:$0xf]
        %v438 = vld [vmem:[#allocation5 + $0x130] sm:$0xf]
        %v439 = vld [vmem:[#allocation5 + $0x134] sm:$0xf]
        %v440 = vld [vmem:[#allocation5 + $0x138] sm:$0xf]
        %v441 = vld [vmem:[#allocation5 + $0x13c] sm:$0xf]
        %v442 = vld [vmem:[#allocation5 + $0x140] sm:$0xf]
        %v443 = vld [vmem:[#allocation5 + $0x144] sm:$0xf]
        %v444 = vld [vmem:[#allocation5 + $0x148] sm:$0xf]
        %v445 = vld [vmem:[#allocation5 + $0x14c] sm:$0xf]
        %v446 = vld [vmem:[#allocation5 + $0x150] sm:$0xf]
        %v447 = vld [vmem:[#allocation5 + $0x154] sm:$0xf]
        %v448 = vld [vmem:[#allocation5 + $0x158] sm:$0xf]
        %v449 = vld [vmem:[#allocation5 + $0x15c] sm:$0xf]
        %v450 = vld [vmem:[#allocation5 + $0x160] sm:$0xf]
        %v451 = vld [vmem:[#allocation5 + $0x164] sm:$0xf]
        %v452 = vld [vmem:[#allocation5 + $0x168] sm:$0xf]
        %v453 = vld [vmem:[#allocation5 + $0x16c] sm:$0xf]
        %v454 = vld [vmem:[#allocation5 + $0x170] sm:$0xf]
        %v455 = vld [vmem:[#allocation5 + $0x174] sm:$0xf]
        %v456 = vld [vmem:[#allocation5 + $0x178] sm:$0xf]
        %v457 = vld [vmem:[#allocation5 + $0x17c] sm:$0xf]
        %v458 = vld [vmem:[#allocation5 + $0x180] sm:$0xf]
        %v459 = vld [vmem:[#allocation5 + $0x184] sm:$0xf]
        %v460 = vld [vmem:[%s2] sm:$0x1]
        %v462 = vperm.slane %v460, 0
        %v562 = vunpack.c.l.b16 %v362
        %v563 = vunpack.c.l.b16 %v363
        %v564 = vunpack.c.l.b16 %v364
        %v565 = vunpack.c.l.b16 %v365
        %v566 = vunpack.c.l.b16 %v366
        %v567 = vunpack.c.l.b16 %v367
        %v568 = vunpack.c.l.b16 %v368
        %v569 = vunpack.c.l.b16 %v369
        %v570 = vunpack.c.l.b16 %v370
        %v571 = vunpack.c.l.b16 %v371
        %v572 = vunpack.c.l.b16 %v372
        %v573 = vunpack.c.l.b16 %v373
        %v574 = vunpack.c.l.b16 %v374
        %v575 = vunpack.c.l.b16 %v375
        %v576 = vunpack.c.l.b16 %v376
        %v577 = vunpack.c.l.b16 %v377
        %v578 = vunpack.c.l.b16 %v378
        %v579 = vunpack.c.l.b16 %v379
        %v580 = vunpack.c.l.b16 %v380
        %v581 = vunpack.c.l.b16 %v381
        %v582 = vunpack.c.l.b16 %v382
        %v583 = vunpack.c.l.b16 %v383
        %v584 = vunpack.c.l.b16 %v384
        %v585 = vunpack.c.l.b16 %v385
        %v586 = vunpack.c.l.b16 %v386
        %v587 = vunpack.c.l.b16 %v387
        %v588 = vunpack.c.l.b16 %v388
        %v589 = vunpack.c.l.b16 %v389
        %v590 = vunpack.c.l.b16 %v390
        %v591 = vunpack.c.l.b16 %v391
        %v592 = vunpack.c.l.b16 %v392
        %v593 = vunpack.c.l.b16 %v393
        %v594 = vunpack.c.l.b16 %v394
        %v595 = vunpack.c.l.b16 %v395
        %v596 = vunpack.c.l.b16 %v396
        %v597 = vunpack.c.l.b16 %v397
        %v598 = vunpack.c.l.b16 %v398
        %v599 = vunpack.c.l.b16 %v399
        %v600 = vunpack.c.l.b16 %v400
        %v601 = vunpack.c.l.b16 %v401
        %v602 = vunpack.c.l.b16 %v402
        %v603 = vunpack.c.l.b16 %v403
        %v604 = vunpack.c.l.b16 %v404
        %v605 = vunpack.c.l.b16 %v405
        %v606 = vunpack.c.l.b16 %v406
        %v607 = vunpack.c.l.b16 %v407
        %v608 = vunpack.c.l.b16 %v408
        %v609 = vunpack.c.l.b16 %v409
        %v610 = vunpack.c.l.b16 %v410
        %v611 = vunpack.c.l.b16 %v411
        %v612 = vunpack.c.l.b16 %v412
        %v613 = vunpack.c.l.b16 %v413
        %v614 = vunpack.c.l.b16 %v414
        %v615 = vunpack.c.l.b16 %v415
        %v616 = vunpack.c.l.b16 %v416
        %v617 = vunpack.c.l.b16 %v417
        %v618 = vunpack.c.l.b16 %v418
        %v619 = vunpack.c.l.b16 %v419
        %v620 = vunpack.c.l.b16 %v420
        %v621 = vunpack.c.l.b16 %v421
        %v622 = vunpack.c.l.b16 %v422
        %v623 = vunpack.c.l.b16 %v423
        %v624 = vunpack.c.l.b16 %v424
        %v625 = vunpack.c.l.b16 %v425
        %v626 = vunpack.c.l.b16 %v426
        %v627 = vunpack.c.l.b16 %v427
        %v628 = vunpack.c.l.b16 %v428
        %v629 = vunpack.c.l.b16 %v429
        %v630 = vunpack.c.l.b16 %v430
        %v631 = vunpack.c.l.b16 %v431
        %v632 = vunpack.c.l.b16 %v432
        %v633 = vunpack.c.l.b16 %v433
        %v634 = vunpack.c.l.b16 %v434
        %v635 = vunpack.c.l.b16 %v435
        %v636 = vunpack.c.l.b16 %v436
        %v637 = vunpack.c.l.b16 %v437
        %v638 = vunpack.c.l.b16 %v438
        %v639 = vunpack.c.l.b16 %v439
        %v640 = vunpack.c.l.b16 %v440
        %v641 = vunpack.c.l.b16 %v441
        %v642 = vunpack.c.l.b16 %v442
        %v643 = vunpack.c.l.b16 %v443
        %v644 = vunpack.c.l.b16 %v444
        %v645 = vunpack.c.l.b16 %v445
        %v646 = vunpack.c.l.b16 %v446
        %v647 = vunpack.c.l.b16 %v447
        %v648 = vunpack.c.l.b16 %v448
        %v649 = vunpack.c.l.b16 %v449
        %v650 = vunpack.c.l.b16 %v450
        %v651 = vunpack.c.l.b16 %v451
        %v652 = vunpack.c.l.b16 %v452
        %v653 = vunpack.c.l.b16 %v453
        %v654 = vunpack.c.l.b16 %v454
        %v655 = vunpack.c.l.b16 %v455
        %v656 = vunpack.c.l.b16 %v456
        %v657 = vunpack.c.l.b16 %v457
        %v658 = vunpack.c.l.b16 %v458
        %v659 = vunpack.c.l.b16 %v459
        %v660 = vpack.c.b16 %v563, %v562
        %v661 = vpack.c.b16 %v565, %v564
        %v662 = vpack.c.b16 %v567, %v566
        %v663 = vpack.c.b16 %v569, %v568
        %v664 = vpack.c.b16 %v571, %v570
        %v665 = vpack.c.b16 %v573, %v572
        %v666 = vpack.c.b16 %v575, %v574
        %v667 = vpack.c.b16 %v577, %v576
        %v668 = vpack.c.b16 %v579, %v578
        %v669 = vpack.c.b16 %v581, %v580
        %v670 = vpack.c.b16 %v583, %v582
        %v671 = vpack.c.b16 %v585, %v584
        %v672 = vpack.c.b16 %v587, %v586
        %v673 = vpack.c.b16 %v589, %v588
        %v674 = vpack.c.b16 %v591, %v590
        %v675 = vpack.c.b16 %v593, %v592
        %v676 = vpack.c.b16 %v595, %v594
        %v677 = vpack.c.b16 %v597, %v596
        %v678 = vpack.c.b16 %v599, %v598
        %v679 = vpack.c.b16 %v601, %v600
        %v680 = vpack.c.b16 %v603, %v602
        %v681 = vpack.c.b16 %v605, %v604
        %v682 = vpack.c.b16 %v607, %v606
        %v683 = vpack.c.b16 %v609, %v608
        %v684 = vpack.c.b16 %v611, %v610
        %v685 = vpack.c.b16 %v613, %v612
        %v686 = vpack.c.b16 %v615, %v614
        %v687 = vpack.c.b16 %v617, %v616
        %v688 = vpack.c.b16 %v619, %v618
        %v689 = vpack.c.b16 %v621, %v620
        %v690 = vpack.c.b16 %v623, %v622
        %v691 = vpack.c.b16 %v625, %v624
        %v692 = vpack.c.b16 %v627, %v626
        %v693 = vpack.c.b16 %v629, %v628
        %v694 = vpack.c.b16 %v631, %v630
        %v695 = vpack.c.b16 %v633, %v632
        %v696 = vpack.c.b16 %v635, %v634
        %v697 = vpack.c.b16 %v637, %v636
        %v698 = vpack.c.b16 %v639, %v638
        %v699 = vpack.c.b16 %v641, %v640
        %v700 = vpack.c.b16 %v643, %v642
        %v701 = vpack.c.b16 %v645, %v644
        %v702 = vpack.c.b16 %v647, %v646
        %v703 = vpack.c.b16 %v649, %v648
        %v704 = vpack.c.b16 %v651, %v650
        %v705 = vpack.c.b16 %v653, %v652
        %v706 = vpack.c.b16 %v655, %v654
        %v707 = vpack.c.b16 %v657, %v656
        %v708 = vpack.c.b16 %v659, %v658
        %vm758 = vcmask 130048
        %v760 = vsel %vm758, %v361, 0
        %762 = vmatpush.bf16.msra.mxu0 %v667
        %763 = vmatpush.bf16.msra.mxu0 %v666
        %764 = vmatpush.bf16.msra.mxu0 %v665
        %765 = vmatpush.bf16.msra.mxu0 %v664
        %766 = vmatpush.bf16.msra.mxu0 %v663
        %767 = vmatpush.bf16.msra.mxu0 %v662
        %768 = vmatpush.bf16.msra.mxu0 %v661
        %769 = vmatpush.bf16.msra.mxu0 %v660
        %770 = vmatmul.bf16.gmra.mxu0 %v355
        %v771 = vpop.f32.mrf.mxu0
        %v772 = vadd.f32 %v462, %v771
        %v773 = vpop.f32.mrf.mxu0
        %774 = vdwg.mxu0
        %775 = vmatpush.bf16.msra.mxu0 %v675
        %776 = vmatpush.bf16.msra.mxu0 %v674
        %777 = vmatpush.bf16.msra.mxu0 %v673
        %778 = vmatpush.bf16.msra.mxu0 %v672
        %779 = vmatpush.bf16.msra.mxu0 %v671
        %780 = vmatpush.bf16.msra.mxu0 %v670
        %781 = vmatpush.bf16.msra.mxu0 %v669
        %782 = vmatpush.bf16.msra.mxu0 %v668
        %783 = vmatmul.bf16.gmra.mxu0 %v356
        %v784 = vpop.f32.mrf.mxu0
        %v785 = vadd.f32 %v772, %v784
        %v786 = vpop.f32.mrf.mxu0
        %787 = vdwg.mxu0
        %788 = vmatpush.bf16.msra.mxu0 %v683
        %789 = vmatpush.bf16.msra.mxu0 %v682
        %790 = vmatpush.bf16.msra.mxu0 %v681
        %791 = vmatpush.bf16.msra.mxu0 %v680
        %792 = vmatpush.bf16.msra.mxu0 %v679
        %793 = vmatpush.bf16.msra.mxu0 %v678
        %794 = vmatpush.bf16.msra.mxu0 %v677
        %795 = vmatpush.bf16.msra.mxu0 %v676
        %796 = vmatmul.bf16.gmra.mxu0 %v357
        %v797 = vpop.f32.mrf.mxu0
        %v798 = vadd.f32 %v785, %v797
        %v799 = vpop.f32.mrf.mxu0
        %800 = vdwg.mxu0
        %801 = vmatpush.bf16.msra.mxu0 %v691
        %802 = vmatpush.bf16.msra.mxu0 %v690
        %803 = vmatpush.bf16.msra.mxu0 %v689
        %804 = vmatpush.bf16.msra.mxu0 %v688
        %805 = vmatpush.bf16.msra.mxu0 %v687
        %806 = vmatpush.bf16.msra.mxu0 %v686
        %807 = vmatpush.bf16.msra.mxu0 %v685
        %808 = vmatpush.bf16.msra.mxu0 %v684
        %809 = vmatmul.bf16.gmra.mxu0 %v358
        %v810 = vpop.f32.mrf.mxu0
        %v811 = vadd.f32 %v798, %v810
        %v812 = vpop.f32.mrf.mxu0
        %813 = vdwg.mxu0
        %814 = vmatpush.bf16.msra.mxu0 %v699
        %815 = vmatpush.bf16.msra.mxu0 %v698
        %816 = vmatpush.bf16.msra.mxu0 %v697
        %817 = vmatpush.bf16.msra.mxu0 %v696
        %818 = vmatpush.bf16.msra.mxu0 %v695
        %819 = vmatpush.bf16.msra.mxu0 %v694
        %820 = vmatpush.bf16.msra.mxu0 %v693
        %821 = vmatpush.bf16.msra.mxu0 %v692
        %822 = vmatmul.bf16.gmra.mxu0 %v359
        %v823 = vpop.f32.mrf.mxu0
        %v824 = vadd.f32 %v811, %v823
        %v825 = vpop.f32.mrf.mxu0
        %826 = vdwg.mxu0
        %827 = vmatpush.bf16.msra.mxu0 %v707
        %828 = vmatpush.bf16.msra.mxu0 %v706
        %829 = vmatpush.bf16.msra.mxu0 %v705
        %830 = vmatpush.bf16.msra.mxu0 %v704
        %831 = vmatpush.bf16.msra.mxu0 %v703
        %832 = vmatpush.bf16.msra.mxu0 %v702
        %833 = vmatpush.bf16.msra.mxu0 %v701
        %834 = vmatpush.bf16.msra.mxu0 %v700
        %835 = vmatmul.bf16.gmra.mxu0 %v360
        %v836 = vpop.f32.mrf.mxu0
        %v837 = vadd.f32 %v824, %v836
        %v838 = vpop.f32.mrf.mxu0
        %839 = vdwg.mxu0
        %840 = vmatpush.bf16.msra.mxu0 0
        %841 = vmatpush.bf16.msra.mxu0 0
        %842 = vmatpush.bf16.msra.mxu0 0
        %843 = vmatpush.bf16.msra.mxu0 0
        %844 = vmatpush.bf16.msra.mxu0 0
        %845 = vmatpush.bf16.msra.mxu0 0
        %846 = vmatpush.bf16.msra.mxu0 0
        %847 = vmatpush.bf16.msra.mxu0 %v708
        %848 = vmatmul.bf16.gmra.mxu0 %v760
        %v849 = vpop.f32.mrf.mxu0
        %v850 = vadd.f32 %v837, %v849
        %v851 = vpop.f32.mrf.mxu0
        %852 = vdwg.mxu0
        %v853 = vmax.f32 %v850, 0.0
        %v854 = vpack.c.bf16 %v853, %v853
        %v855 = vld [vmem:[#allocation7] sm:$0xff]
        %v856 = vld [vmem:[#allocation7 + $0x8] sm:$0xff]
        %v857 = vld [vmem:[#allocation7 + $0x10] sm:$0xff]
        %v858 = vld [vmem:[#allocation7 + $0x18] sm:$0xff]
        %v859 = vld [vmem:[#allocation7 + $0x20] sm:$0xff]
        %v860 = vld [vmem:[#allocation7 + $0x28] sm:$0xff]
        %v861 = vld [vmem:[#allocation7 + $0x30] sm:$0xff]
        %v862 = vld [vmem:[#allocation7 + $0x38] sm:$0xff]
        %v863 = vld [vmem:[#allocation7 + $0x40] sm:$0xff]
        %v864 = vld [vmem:[#allocation7 + $0x48] sm:$0xff]
        %v865 = vld [vmem:[#allocation7 + $0x50] sm:$0xff]
        %v866 = vld [vmem:[#allocation7 + $0x58] sm:$0xff]
        %v867 = vld [vmem:[#allocation7 + $0x60] sm:$0xff]
        %v868 = vld [vmem:[#allocation7 + $0x68] sm:$0xff]
        %v869 = vld [vmem:[#allocation7 + $0x70] sm:$0xff]
        %v870 = vld [vmem:[#allocation7 + $0x78] sm:$0xff]
        %v871 = vld [vmem:[%s4] sm:$0x3]
        %v873 = vperm.slane %v871, 0
        %v874 = vperm.slane %v871, 1
        %v893 = vunpack.c.l.b16 %v855
        %v894 = vunpack.c.h.b16 %v855
        %v895 = vunpack.c.l.b16 %v856
        %v896 = vunpack.c.h.b16 %v856
        %v897 = vunpack.c.l.b16 %v857
        %v898 = vunpack.c.h.b16 %v857
        %v899 = vunpack.c.l.b16 %v858
        %v900 = vunpack.c.h.b16 %v858
        %v901 = vunpack.c.l.b16 %v859
        %v902 = vunpack.c.h.b16 %v859
        %v903 = vunpack.c.l.b16 %v860
        %v904 = vunpack.c.h.b16 %v860
        %v905 = vunpack.c.l.b16 %v861
        %v906 = vunpack.c.h.b16 %v861
        %v907 = vunpack.c.l.b16 %v862
        %v908 = vunpack.c.h.b16 %v862
        %v909 = vunpack.c.l.b16 %v863
        %v910 = vunpack.c.h.b16 %v863
        %v911 = vunpack.c.l.b16 %v864
        %v912 = vunpack.c.h.b16 %v864
        %v913 = vunpack.c.l.b16 %v865
        %v914 = vunpack.c.h.b16 %v865
        %v915 = vunpack.c.l.b16 %v866
        %v916 = vunpack.c.h.b16 %v866
        %v917 = vunpack.c.l.b16 %v867
        %v918 = vunpack.c.h.b16 %v867
        %v919 = vunpack.c.l.b16 %v868
        %v920 = vunpack.c.h.b16 %v868
        %v921 = vunpack.c.l.b16 %v869
        %v922 = vunpack.c.h.b16 %v869
        %v923 = vunpack.c.l.b16 %v870
        %v924 = vunpack.c.h.b16 %v870
        %v925 = vpack.c.b16 %v895, %v893
        %v926 = vpack.c.b16 %v896, %v894
        %v927 = vpack.c.b16 %v899, %v897
        %v928 = vpack.c.b16 %v900, %v898
        %v929 = vpack.c.b16 %v903, %v901
        %v930 = vpack.c.b16 %v904, %v902
        %v931 = vpack.c.b16 %v907, %v905
        %v932 = vpack.c.b16 %v908, %v906
        %v933 = vpack.c.b16 %v911, %v909
        %v934 = vpack.c.b16 %v912, %v910
        %v935 = vpack.c.b16 %v915, %v913
        %v936 = vpack.c.b16 %v916, %v914
        %v937 = vpack.c.b16 %v919, %v917
        %v938 = vpack.c.b16 %v920, %v918
        %v939 = vpack.c.b16 %v923, %v921
        %v940 = vpack.c.b16 %v924, %v922
        %957 = vmatpush.bf16.msra.mxu0 %v939
        %958 = vmatpush.bf16.msra.mxu0 %v937
        %959 = vmatpush.bf16.msra.mxu0 %v935
        %960 = vmatpush.bf16.msra.mxu0 %v933
        %961 = vmatpush.bf16.msra.mxu0 %v931
        %962 = vmatpush.bf16.msra.mxu0 %v929
        %963 = vmatpush.bf16.msra.mxu0 %v927
        %964 = vmatpush.bf16.msra.mxu0 %v925
        %965 = vmatmul.bf16.gmra.mxu0 %v854
        %v966 = vpop.f32.mrf.mxu0
        %v967 = vadd.f32 %v873, %v966
        %v968 = vpop.f32.mrf.mxu0
        %969 = vdwg.mxu0
        %970 = vmatpush.bf16.msra.mxu0 %v940
        %971 = vmatpush.bf16.msra.mxu0 %v938
        %972 = vmatpush.bf16.msra.mxu0 %v936
        %973 = vmatpush.bf16.msra.mxu0 %v934
        %974 = vmatpush.bf16.msra.mxu0 %v932
        %975 = vmatpush.bf16.msra.mxu0 %v930
        %976 = vmatpush.bf16.msra.mxu0 %v928
        %977 = vmatpush.bf16.msra.mxu0 %v926
        %978 = vmatmul.bf16.gmra.mxu0 %v854
        %v979 = vpop.f32.mrf.mxu0
        %v980 = vadd.f32 %v874, %v979
        %v981 = vpop.f32.mrf.mxu0
        %982 = vdwg.mxu0
        %v983 = vmax.f32 %v967, 0.0
        %v984 = vmax.f32 %v980, 0.0
        %v985 = vpack.c.bf16 %v983, %v983
        %v986 = vpack.c.bf16 %v984, %v984
        %v987 = vld [vmem:[#allocation8] sm:$0xf]
        %v988 = vld [vmem:[#allocation8 + $0x4] sm:$0xf]
        %v989 = vld [vmem:[#allocation8 + $0x8] sm:$0xf]
        %v990 = vld [vmem:[#allocation8 + $0xc] sm:$0xf]
        %v991 = vld [vmem:[#allocation8 + $0x10] sm:$0xf]
        %v992 = vld [vmem:[#allocation8 + $0x14] sm:$0xf]
        %v993 = vld [vmem:[#allocation8 + $0x18] sm:$0xf]
        %v994 = vld [vmem:[#allocation8 + $0x1c] sm:$0xf]
        %v995 = vld [vmem:[#allocation8 + $0x20] sm:$0xf]
        %v996 = vld [vmem:[#allocation8 + $0x24] sm:$0xf]
        %v997 = vld [vmem:[#allocation8 + $0x28] sm:$0xf]
        %v998 = vld [vmem:[#allocation8 + $0x2c] sm:$0xf]
        %v999 = vld [vmem:[#allocation8 + $0x30] sm:$0xf]
        %v1000 = vld [vmem:[#allocation8 + $0x34] sm:$0xf]
        %v1001 = vld [vmem:[#allocation8 + $0x38] sm:$0xf]
        %v1002 = vld [vmem:[#allocation8 + $0x3c] sm:$0xf]
        %v1003 = vld [vmem:[#allocation8 + $0x40] sm:$0xf]
        %v1004 = vld [vmem:[#allocation8 + $0x44] sm:$0xf]
        %v1005 = vld [vmem:[#allocation8 + $0x48] sm:$0xf]
        %v1006 = vld [vmem:[#allocation8 + $0x4c] sm:$0xf]
        %v1007 = vld [vmem:[#allocation8 + $0x50] sm:$0xf]
        %v1008 = vld [vmem:[#allocation8 + $0x54] sm:$0xf]
        %v1009 = vld [vmem:[#allocation8 + $0x58] sm:$0xf]
        %v1010 = vld [vmem:[#allocation8 + $0x5c] sm:$0xf]
        %v1011 = vld [vmem:[#allocation8 + $0x60] sm:$0xf]
        %v1012 = vld [vmem:[#allocation8 + $0x64] sm:$0xf]
        %v1013 = vld [vmem:[#allocation8 + $0x68] sm:$0xf]
        %v1014 = vld [vmem:[#allocation8 + $0x6c] sm:$0xf]
        %v1015 = vld [vmem:[#allocation8 + $0x70] sm:$0xf]
        %v1016 = vld [vmem:[#allocation8 + $0x74] sm:$0xf]
        %v1017 = vld [vmem:[#allocation8 + $0x78] sm:$0xf]
        %v1018 = vld [vmem:[#allocation8 + $0x7c] sm:$0xf]
        %v1019 = vld [vmem:[%s6] sm:$0x1]
        %v1021 = vperm.slane %v1019, 0
        %v1055 = vunpack.c.l.b16 %v987
        %v1056 = vunpack.c.l.b16 %v988
        %v1057 = vunpack.c.l.b16 %v989
        %v1058 = vunpack.c.l.b16 %v990
        %v1059 = vunpack.c.l.b16 %v991
        %v1060 = vunpack.c.l.b16 %v992
        %v1061 = vunpack.c.l.b16 %v993
        %v1062 = vunpack.c.l.b16 %v994
        %v1063 = vunpack.c.l.b16 %v995
        %v1064 = vunpack.c.l.b16 %v996
        %v1065 = vunpack.c.l.b16 %v997
        %v1066 = vunpack.c.l.b16 %v998
        %v1067 = vunpack.c.l.b16 %v999
        %v1068 = vunpack.c.l.b16 %v1000
        %v1069 = vunpack.c.l.b16 %v1001
        %v1070 = vunpack.c.l.b16 %v1002
        %v1071 = vunpack.c.l.b16 %v1003
        %v1072 = vunpack.c.l.b16 %v1004
        %v1073 = vunpack.c.l.b16 %v1005
        %v1074 = vunpack.c.l.b16 %v1006
        %v1075 = vunpack.c.l.b16 %v1007
        %v1076 = vunpack.c.l.b16 %v1008
        %v1077 = vunpack.c.l.b16 %v1009
        %v1078 = vunpack.c.l.b16 %v1010
        %v1079 = vunpack.c.l.b16 %v1011
        %v1080 = vunpack.c.l.b16 %v1012
        %v1081 = vunpack.c.l.b16 %v1013
        %v1082 = vunpack.c.l.b16 %v1014
        %v1083 = vunpack.c.l.b16 %v1015
        %v1084 = vunpack.c.l.b16 %v1016
        %v1085 = vunpack.c.l.b16 %v1017
        %v1086 = vunpack.c.l.b16 %v1018
        %v1087 = vpack.c.b16 %v1056, %v1055
        %v1088 = vpack.c.b16 %v1058, %v1057
        %v1089 = vpack.c.b16 %v1060, %v1059
        %v1090 = vpack.c.b16 %v1062, %v1061
        %v1091 = vpack.c.b16 %v1064, %v1063
        %v1092 = vpack.c.b16 %v1066, %v1065
        %v1093 = vpack.c.b16 %v1068, %v1067
        %v1094 = vpack.c.b16 %v1070, %v1069
        %v1095 = vpack.c.b16 %v1072, %v1071
        %v1096 = vpack.c.b16 %v1074, %v1073
        %v1097 = vpack.c.b16 %v1076, %v1075
        %v1098 = vpack.c.b16 %v1078, %v1077
        %v1099 = vpack.c.b16 %v1080, %v1079
        %v1100 = vpack.c.b16 %v1082, %v1081
        %v1101 = vpack.c.b16 %v1084, %v1083
        %v1102 = vpack.c.b16 %v1086, %v1085
        %1119 = vmatpush.bf16.msra.mxu0 %v1094
        %1120 = vmatpush.bf16.msra.mxu0 %v1093
        %1121 = vmatpush.bf16.msra.mxu0 %v1092
        %1122 = vmatpush.bf16.msra.mxu0 %v1091
        %1123 = vmatpush.bf16.msra.mxu0 %v1090
        %1124 = vmatpush.bf16.msra.mxu0 %v1089
        %1125 = vmatpush.bf16.msra.mxu0 %v1088
        %1126 = vmatpush.bf16.msra.mxu0 %v1087
        %1127 = vmatmul.bf16.gmra.mxu0 %v985
        %v1128 = vpop.f32.mrf.mxu0
        %v1129 = vadd.f32 %v1021, %v1128
        %v1130 = vpop.f32.mrf.mxu0
        %1131 = vdwg.mxu0
        %1132 = vmatpush.bf16.msra.mxu0 %v1102
        %1133 = vmatpush.bf16.msra.mxu0 %v1101
        %1134 = vmatpush.bf16.msra.mxu0 %v1100
        %1135 = vmatpush.bf16.msra.mxu0 %v1099
        %1136 = vmatpush.bf16.msra.mxu0 %v1098
        %1137 = vmatpush.bf16.msra.mxu0 %v1097
        %1138 = vmatpush.bf16.msra.mxu0 %v1096
        %1139 = vmatpush.bf16.msra.mxu0 %v1095
        %1140 = vmatmul.bf16.gmra.mxu0 %v986
        %v1141 = vpop.f32.mrf.mxu0
        %v1142 = vadd.f32 %v1129, %v1141
        %v1143 = vpop.f32.mrf.mxu0
        %1144 = vdwg.mxu0
        %1145 = vst [vmem:[%s346] sm:$0xff] %v1142
        %s1146 = sand.u32 %s186, 1
        %s1147 = scalar_lea.sflag [#allocation4], %s1146
        %s1148 = sand.u32 %s186, 1
        %s1149 = smul.addr %s1148, 8
        %s1150 = scalar_lea.vmem [#allocation10], %s1149
        // Predicated region
        $region65: #{tpu_custom_call.1} parent=47 // pred_check
          %p1151 = pneg %p196
        $region66: #{tpu_custom_call.1} parent=47 // pred_check_branch
          %1153 = sbr.rel (%p1151) target = $region68
        $region67: #{tpu_custom_call.1} parent=47 // pred_region
          %1155 = vsyncadd %s1147, 0
          %s1156 = smul.addr %s26, 8
          %s1157 = scalar_lea.hbm %s7, %s1156
          %s1159 = sshll.u32 %s1150, 4
          %s1160 = int_to_ptr.vmem [resolvable:$true] %s1159
          %s1161 = sshll.u32 %s1157, 4
          %s1162 = int_to_ptr.hbm [resolvable:$true] %s1161
          %1164 = dma.vmem_to_hbm [thread:$0]  %s1160, 128, %s1162, %s1147
        $region68: #{tpu_custom_call.1} parent=47 // pred_fallthru
          _
      $region48: #{tpu_custom_call.1} parent=5 // pred_fallthru
        _
      %p1165 = scmp.le.s32.totalorder 2, %s21
      // Predicated region
      $region69: #{tpu_custom_call.1} parent=5 // pred_check
        %p1166 = pneg %p1165
      $region70: #{tpu_custom_call.1} parent=5 // pred_check_branch
        %1168 = sbr.rel (%p1166) target = $region72
      $region71: #{tpu_custom_call.1} parent=5 // pred_region
        %s1169 = ssub.s32 %s21, 2
        // Predicated region
        $region73: #{tpu_custom_call.1} parent=71 // pred_check
          %p1170 = pneg %p202
        $region74: #{tpu_custom_call.1} parent=71 // pred_check_branch
          %1172 = sbr.rel (%p1170) target = $region76
        $region75: #{tpu_custom_call.1} parent=71 // pred_region
          %s1173 = sand.u32 %s187, 1
          %s1174 = scalar_lea.sflag [#allocation4], %s1173
          %s1175 = sand.u32 %s187, 1
          %s1176 = smul.addr %s1175, 8
          %s1177 = scalar_lea.vmem [#allocation10], %s1176
          %1179 = dma.done %s1174, 128
        $region76: #{tpu_custom_call.1} parent=71 // pred_fallthru
          _
      $region72: #{tpu_custom_call.1} parent=5 // pred_fallthru
        _
    $region6: #{tpu_custom_call.1} parent=1 // loop_footer
      %s25 = sadd.s32 1, %s21
    $region7: #{tpu_custom_call.1} parent=1 // loop_footer_branch
      %20 = sbr.rel target = $region3
    $region8: #{tpu_custom_call.1} parent=1 // loop_exit
      _
    %1180 = vsyncpa [#allocation3], 1
    %s1181 = scalar_lea.sflag [#allocation3], 1
    %1182 = vsyncpa %s1181, 1
    %1183 = vsyncpa [#allocation6], 1
    %1184 = vsyncpa [#allocation9], 1
    %1185 = vsyncpa [#allocation4], 1
    %s1186 = scalar_lea.sflag [#allocation4], 1
    %1187 = vsyncpa %s1186, 1

</llo_original>
